<compile_context>
chip_gen: v6e
topology: v6e:2x2x1
jax: 0.10.0
libtpu: 0.0.40
codegen_flags: <defaults>
</compile_context>

<pallas_src>
import functools

import jax
import jax.numpy as jnp
from jax import lax
from jax.experimental import pallas as pl
from jax.experimental.pallas import tpu as pltpu


def _round_up(x, m):
    return (x + m - 1) // m * m


def _vmem_capacity_bytes():
    """Physical VMEM per TensorCore; conservative (v7x) default if unknown."""
    try:
        cap = getattr(pltpu.get_tpu_info(), "vmem_capacity_bytes", None)
        if cap:
            return int(cap)
    except Exception:  # hardware query only; kernel path never relies on this
        pass
    return 64 * 1024 * 1024


def mlp_kernel(x_ref, w1_ref, b1_ref, w2_ref, b2_ref, w3_ref, b3_ref, o_ref,
               *, n_chunks, chunk_m, compute_dtype):
    # Grid-invariant weights/biases: load once per grid step (single-buffered
    # in VMEM via pl.Buffered(1) on their BlockSpecs).
    w1 = w1_ref[...]
    b1 = b1_ref[...]
    w2 = w2_ref[...]
    b2 = b2_ref[...]
    w3 = w3_ref[...]
    b3 = b3_ref[...]

    def chunk(j, carry):
        r = pl.multiple_of(j * chunk_m, 8)
        # f32 tile from HBM, cast to bf16 on the VPU (filler under the MXU).
        xs = x_ref[pl.ds(r, chunk_m), :].astype(compute_dtype)
        # Layer 1: bf16 matmul, f32 MXU accumulation, f32 bias + tanh (EUP).
        h = jnp.tanh(jnp.dot(xs, w1, preferred_element_type=jnp.float32) + b1)
        # Hidden layer.
        h = jnp.tanh(jnp.dot(h.astype(compute_dtype), w2,
                             preferred_element_type=jnp.float32) + b2)
        # Output layer (no activation); lane-dense store.
        out = jnp.dot(h.astype(compute_dtype), w3,
                      preferred_element_type=jnp.float32) + b3
        o_ref[pl.ds(r, chunk_m), :] = out.astype(o_ref.dtype)
        return carry

    # Unrolled so chunk j+1's matmuls overlap chunk j's tanh/bias epilogue.
    lax.fori_loop(0, n_chunks, chunk, 0, unroll=True)


def _build_specs(block_batch, input_dim, hid_pad, out_pad, single_buffer_weights):
    # Weights/biases never change across grid steps -> constant index map
    # (fetched once by the pipeline) and single VMEM buffer.
    wkw = dict(pipeline_mode=pl.Buffered(1)) if single_buffer_weights else {}
    in_specs = [
        # x: f32, feature dim carried as a full-extent block (no wrapper pad).
        pl.BlockSpec((block_batch, input_dim), lambda i: (i, 0)),
        pl.BlockSpec((input_dim, hid_pad), lambda i: (0, 0), **wkw),
        pl.BlockSpec((1, hid_pad), lambda i: (0, 0), **wkw),
        pl.BlockSpec((hid_pad, hid_pad), lambda i: (0, 0), **wkw),
        pl.BlockSpec((1, hid_pad), lambda i: (0, 0), **wkw),
        pl.BlockSpec((hid_pad, out_pad), lambda i: (0, 0), **wkw),
        pl.BlockSpec((1, out_pad), lambda i: (0, 0), **wkw),
    ]
    out_spec = pl.BlockSpec((block_batch, out_pad), lambda i: (i, 0))
    return in_specs, out_spec


def prepare_params(params, compute_dtype=jnp.bfloat16):
    """One-time pad (hidden/output dims -> multiples of 128) + bf16 cast.

    Hoisted out of mlp_forward so the per-call wrapper does zero weight HBM
    traffic. Padding is exact: padded cols/rows and biases are 0, tanh(0)=0,
    so padded lanes stay 0 and are sliced off after the kernel.
    """
    w1, b1, w2, b2, w3, b3 = (params["w1"], params["b1"], params["w2"],
                              params["b2"], params["w3"], params["b3"])
    input_dim, hidden_dim = w1.shape
    output_dim = w3.shape[1]
    hid_pad = _round_up(hidden_dim, 128)
    out_pad = _round_up(output_dim, 128)
    dh = hid_pad - hidden_dim
    do = out_pad - output_dim

    prep = {
        "w1": jnp.pad(w1, ((0, 0), (0, dh))).astype(compute_dtype),
        "b1": jnp.pad(b1.reshape(1, -1), ((0, 0), (0, dh))).astype(jnp.float32),
        "w2": jnp.pad(w2, ((0, dh), (0, dh))).astype(compute_dtype),
        "b2": jnp.pad(b2.reshape(1, -1), ((0, 0), (0, dh))).astype(jnp.float32),
        "w3": jnp.pad(w3, ((0, dh), (0, do))).astype(compute_dtype),
        "b3": jnp.pad(b3.reshape(1, -1), ((0, 0), (0, do))).astype(jnp.float32),
    }
    dims = dict(input_dim=input_dim, hidden_dim=hidden_dim, output_dim=output_dim,
                hid_pad=hid_pad, out_pad=out_pad,
                compute_dtype=jnp.dtype(compute_dtype))
    return prep, dims


def _working_set_bytes(block_batch, chunk_m, input_dim, hid_pad, out_pad,
                       compute_bpe, out_bpe):
    in_lane = _round_up(max(input_dim, 1), 128)   # VMEM lane padding of x tile
    w_bytes = (input_dim * hid_pad + hid_pad * hid_pad + hid_pad * out_pad) * compute_bpe \
              + (2 * hid_pad + out_pad) * 4
    x_bytes = 2 * block_batch * in_lane * 4       # double-buffered f32 input tile
    o_bytes = 2 * block_batch * out_pad * out_bpe # double-buffered output tile
    inter = 4 * chunk_m * hid_pad * 4             # per-chunk f32 intermediates + slack
    return w_bytes + x_bytes + o_bytes + inter


def mlp_forward(x, prep, dims, *, block_batch=None, out_dtype=jnp.float32):
    """x: (B, input_dim) f32; prep/dims from prepare_params()."""
    compute_dtype = dims["compute_dtype"]
    input_dim = dims["input_dim"]
    output_dim = dims["output_dim"]
    hid_pad = dims["hid_pad"]
    out_pad = dims["out_pad"]

    B, xin = x.shape
    assert xin == input_dim, "x feature dim mismatch"

    compute_bpe = jnp.dtype(compute_dtype).itemsize
    out_bpe = jnp.dtype(out_dtype).itemsize

    # --- generation-aware VMEM budget (never request all of physical VMEM) ---
    vmem_cap = _vmem_capacity_bytes()
    vmem_budget = int(vmem_cap * 0.8)   # ~51 MiB on v7x, ~102 MiB on v5e/v6e

    # --- batch tiling: big tiles by default, shrink only if VMEM requires ---
    if block_batch is None:
        block_batch = 1024 if vmem_cap >= 96 * 1024 * 1024 else 512
    B16 = _round_up(B, 16)                       # bf16 sublane tile is (16,128)
    block_batch = max(16, _round_up(min(block_batch, B16), 16))

    def chunks_for(bb):
        if bb >= 512 and bb % 64 == 0:
            return 4
        if bb >= 256 and bb % 32 == 0:
            return 2
        return 1

    while True:
        n_chunks = chunks_for(block_batch)
        ws = _working_set_bytes(block_batch, block_batch // n_chunks, input_dim,
                                hid_pad, out_pad, compute_bpe, out_bpe)
        if ws <= vmem_budget or block_batch <= 128:
            break
        block_batch = max(128, _round_up(block_batch // 2, 16))
    # TODO(synk): if the resident bf16 W2 (hid_pad x hid_pad) alone blows the
    # budget (hidden >= ~4K on v7x / ~8K on v5e/v6e), add an "arbitrary"
    # K/N-tiled grid axis with an f32 VMEM accumulator + pl.when init/finalize
    # instead of loading W2 whole.

    B_pad = _round_up(B16, block_batch)
    grid = (B_pad // block_batch,)

    # Only per-call data movement: optional zero-pad of x rows (no dtype cast,
    # no feature-dim pad — the cast happens in-kernel).
    xp = x if B_pad == B else jnp.pad(x, ((0, B_pad - B), (0, 0)))

    vmem_limit = int(min(vmem_budget, max(ws * 3 // 2, 32 * 1024 * 1024)))

    cost = pl.CostEstimate(
        flops=2 * B_pad * (input_dim * hid_pad + hid_pad * hid_pad + hid_pad * out_pad),
        transcendentals=2 * B_pad * hid_pad,
        bytes_accessed=int(
            B_pad * input_dim * 4
            + (input_dim * hid_pad + hid_pad * hid_pad + hid_pad * out_pad) * compute_bpe
            + (2 * hid_pad + out_pad) * 4
            + B_pad * out_pad * out_bpe),
    )

    kernel = functools.partial(
        mlp_kernel,
        n_chunks=n_chunks,
        chunk_m=block_batch // n_chunks,
        compute_dtype=compute_dtype,
    )

    def run(single_buffer_weights):
        in_specs, out_spec = _build_specs(
            block_batch, input_dim, hid_pad, out_pad, single_buffer_weights)
        return pl.pallas_call(
            kernel,
            out_shape=jax.ShapeDtypeStruct((B_pad, out_pad), out_dtype),
            grid_spec=pltpu.PrefetchScalarGridSpec(
                num_scalar_prefetch=0,
                grid=grid,
                in_specs=in_specs,
                out_specs=out_spec,
            ),
            compiler_params=pltpu.CompilerParams(
                dimension_semantics=("parallel",),
                vmem_limit_bytes=vmem_limit,
            ),
            cost_estimate=cost,
        )(xp, prep["w1"], prep["b1"], prep["w2"], prep["b2"], prep["w3"], prep["b3"])

    # Narrow, explicit fallback for stacks without single-buffer pipeline_mode.
    if hasattr(pl, "Buffered"):
        try:
            out = run(single_buffer_weights=True)
        except (TypeError, NotImplementedError, pltpu.LoweringException):
            out = run(single_buffer_weights=False)
    else:
        out = run(single_buffer_weights=False)

    return out[:B, :output_dim]


def init_params(key, input_dim, hidden_dim, output_dim):
    """Deterministic parameter init (uniform, PyTorch-Linear-style bounds)."""
    k1, k2, k3, k4, k5, k6 = jax.random.split(key, 6)

    def unif(k, shape, fan_in):
        bound = 1.0 / jnp.sqrt(fan_in)
        return jax.random.uniform(k, shape, jnp.float32, -bound, bound)

    return {
        "w1": unif(k1, (input_dim, hidden_dim), input_dim),
        "b1": unif(k2, (1, hidden_dim), input_dim),
        "w2": unif(k3, (hidden_dim, hidden_dim), hidden_dim),
        "b2": unif(k4, (1, hidden_dim), hidden_dim),
        "w3": unif(k5, (hidden_dim, output_dim), hidden_dim),
        "b3": unif(k6, (1, output_dim), hidden_dim),
    }


def mlp_reference(x, p):
    h = jnp.tanh(x @ p["w1"] + p["b1"])
    h = jnp.tanh(h @ p["w2"] + p["b2"])
    return h @ p["w3"] + p["b3"]


if __name__ == "__main__":
    key = jax.random.PRNGKey(0)
    kx, kp = jax.random.split(key)

    batch, input_dim, hidden_dim, output_dim = 32, 16, 32, 8
    x = jax.random.normal(kx, (batch, input_dim), jnp.float32)
    params = init_params(kp, input_dim, hidden_dim, output_dim)

    # One-time weight pad + bf16 cast (hoisted out of the per-call path).
    prep, dims = prepare_params(params)

    out = mlp_forward(x, prep, dims)
    out = jax.block_until_ready(out)

    ref = mlp_reference(x, params)
    assert out.shape == (batch, output_dim)
    # bf16 matmul operands with f32 accumulation: loosened tolerance vs f32 ref.
    assert jnp.allclose(out, ref, atol=5e-2, rtol=5e-2), "mismatch vs reference"

    print("KERNEL_OK")
</pallas_src>

<mosaic_0001>
module attributes {stable_mosaic.version = 11 : i64} {
  func.func @mlp_kernel(%arg0: i32, %arg1: memref<32x16xf32, #tpu.memory_space<vmem>>, %arg2: memref<16x128xbf16, #tpu.memory_space<vmem>>, %arg3: memref<1x128xf32, #tpu.memory_space<vmem>>, %arg4: memref<128x128xbf16, #tpu.memory_space<vmem>>, %arg5: memref<1x128xf32, #tpu.memory_space<vmem>>, %arg6: memref<128x128xbf16, #tpu.memory_space<vmem>>, %arg7: memref<1x128xf32, #tpu.memory_space<vmem>>, %arg8: memref<32x128xf32, #tpu.memory_space<vmem>>) attributes {dimension_semantics = [#tpu.dimension_semantics<parallel>], iteration_bounds = array<i64: 1>, scalar_prefetch = 0 : i64, scratch_operands = 0 : i64, tpu.core_type = #tpu.core_type<tc>, window_params = [{transform_indices = @transform_0, window_bounds = array<i64: 32, 16>}, {pipeline_mode = #tpu.pipeline_mode<synchronous>, transform_indices = @transform_1, window_bounds = array<i64: 16, 128>}, {pipeline_mode = #tpu.pipeline_mode<synchronous>, transform_indices = @transform_2, window_bounds = array<i64: 1, 128>}, {pipeline_mode = #tpu.pipeline_mode<synchronous>, transform_indices = @transform_3, window_bounds = array<i64: 128, 128>}, {pipeline_mode = #tpu.pipeline_mode<synchronous>, transform_indices = @transform_4, window_bounds = array<i64: 1, 128>}, {pipeline_mode = #tpu.pipeline_mode<synchronous>, transform_indices = @transform_5, window_bounds = array<i64: 128, 128>}, {pipeline_mode = #tpu.pipeline_mode<synchronous>, transform_indices = @transform_6, window_bounds = array<i64: 1, 128>}, {transform_indices = @transform_7, window_bounds = array<i64: 32, 128>}]} {
    %c0 = arith.constant 0 : index
    %c0_0 = arith.constant 0 : index
    %0 = vector.load %arg2[%c0, %c0_0] : memref<16x128xbf16, #tpu.memory_space<vmem>>, vector<16x128xbf16>
    %c0_1 = arith.constant 0 : index
    %c0_2 = arith.constant 0 : index
    %1 = vector.load %arg3[%c0_1, %c0_2] : memref<1x128xf32, #tpu.memory_space<vmem>>, vector<1x128xf32>
    %c0_3 = arith.constant 0 : index
    %c0_4 = arith.constant 0 : index
    %2 = vector.load %arg4[%c0_3, %c0_4] : memref<128x128xbf16, #tpu.memory_space<vmem>>, vector<128x128xbf16>
    %c0_5 = arith.constant 0 : index
    %c0_6 = arith.constant 0 : index
    %3 = vector.load %arg5[%c0_5, %c0_6] : memref<1x128xf32, #tpu.memory_space<vmem>>, vector<1x128xf32>
    %c0_7 = arith.constant 0 : index
    %c0_8 = arith.constant 0 : index
    %4 = vector.load %arg6[%c0_7, %c0_8] : memref<128x128xbf16, #tpu.memory_space<vmem>>, vector<128x128xbf16>
    %c0_9 = arith.constant 0 : index
    %c0_10 = arith.constant 0 : index
    %5 = vector.load %arg7[%c0_9, %c0_10] : memref<1x128xf32, #tpu.memory_space<vmem>>, vector<1x128xf32>
    %c0_i32 = arith.constant 0 : i32
    %c32_i32 = arith.constant 32 : i32
    %6 = arith.muli %c0_i32, %c32_i32 : i32
    %7 = tpu.assume_multiple %6, 8 : i32
    %8 = arith.index_cast %7 : i32 to index
    %c0_11 = arith.constant 0 : index
    %9 = vector.load %arg1[%8, %c0_11] : memref<32x16xf32, #tpu.memory_space<vmem>>, vector<32x16xf32>
    %10 = arith.truncf %9 : vector<32x16xf32> to vector<32x16xbf16>
    %cst = arith.constant dense<0.000000e+00> : vector<32x128xf32>
    %11 = tpu.matmul %10, %0, %cst {dimension_numbers = #tpu.dot_dimension_numbers<[1], [0], [0], [1], [0, 0, 1, 1], [], []>} : vector<32x16xbf16>, vector<16x128xbf16>, vector<32x128xf32> -> vector<32x128xf32>
    %12 = vector.broadcast %1 : vector<1x128xf32> to vector<32x128xf32>
    %13 = arith.addf %11, %12 : vector<32x128xf32>
    %14 = math.tanh %13 : vector<32x128xf32>
    %15 = arith.truncf %14 : vector<32x128xf32> to vector<32x128xbf16>
    %cst_12 = arith.constant dense<0.000000e+00> : vector<32x128xf32>
    %16 = tpu.matmul %15, %2, %cst_12 {dimension_numbers = #tpu.dot_dimension_numbers<[1], [0], [0], [1], [0, 0, 1, 1], [], []>} : vector<32x128xbf16>, vector<128x128xbf16>, vector<32x128xf32> -> vector<32x128xf32>
    %17 = vector.broadcast %3 : vector<1x128xf32> to vector<32x128xf32>
    %18 = arith.addf %16, %17 : vector<32x128xf32>
    %19 = math.tanh %18 : vector<32x128xf32>
    %20 = arith.truncf %19 : vector<32x128xf32> to vector<32x128xbf16>
    %cst_13 = arith.constant dense<0.000000e+00> : vector<32x128xf32>
    %21 = tpu.matmul %20, %4, %cst_13 {dimension_numbers = #tpu.dot_dimension_numbers<[1], [0], [0], [1], [0, 0, 1, 1], [], []>} : vector<32x128xbf16>, vector<128x128xbf16>, vector<32x128xf32> -> vector<32x128xf32>
    %22 = vector.broadcast %5 : vector<1x128xf32> to vector<32x128xf32>
    %23 = arith.addf %21, %22 : vector<32x128xf32>
    %24 = arith.index_cast %7 : i32 to index
    %c0_14 = arith.constant 0 : index
    %25 = vector.load %arg8[%24, %c0_14] : memref<32x128xf32, #tpu.memory_space<vmem>>, vector<32x128xf32>
    tpu.vector_store %arg8[%24, %c0_14], %23 {strides = array<i32>} : memref<32x128xf32, #tpu.memory_space<vmem>>, vector<32x128xf32>,
    %c1_i32 = arith.constant 1 : i32
    return
  }
  func.func @transform_0(%arg0: i32) -> (i32, i32) {
    %c0_i32 = arith.constant 0 : i32
    %c0_i32_0 = arith.constant 0 : i32
    return %arg0, %c0_i32 : i32, i32
  }
  func.func @transform_1(%arg0: i32) -> (i32, i32) {
    %c0_i32 = arith.constant 0 : i32
    %c0_i32_0 = arith.constant 0 : i32
    %c0_i32_1 = arith.constant 0 : i32
    return %c0_i32, %c0_i32_0 : i32, i32
  }
  func.func @transform_2(%arg0: i32) -> (i32, i32) {
    %c0_i32 = arith.constant 0 : i32
    %c0_i32_0 = arith.constant 0 : i32
    %c0_i32_1 = arith.constant 0 : i32
    return %c0_i32, %c0_i32_0 : i32, i32
  }
  func.func @transform_3(%arg0: i32) -> (i32, i32) {
    %c0_i32 = arith.constant 0 : i32
    %c0_i32_0 = arith.constant 0 : i32
    %c0_i32_1 = arith.constant 0 : i32
    return %c0_i32, %c0_i32_0 : i32, i32
  }
  func.func @transform_4(%arg0: i32) -> (i32, i32) {
    %c0_i32 = arith.constant 0 : i32
    %c0_i32_0 = arith.constant 0 : i32
    %c0_i32_1 = arith.constant 0 : i32
    return %c0_i32, %c0_i32_0 : i32, i32
  }
  func.func @transform_5(%arg0: i32) -> (i32, i32) {
    %c0_i32 = arith.constant 0 : i32
    %c0_i32_0 = arith.constant 0 : i32
    %c0_i32_1 = arith.constant 0 : i32
    return %c0_i32, %c0_i32_0 : i32, i32
  }
  func.func @transform_6(%arg0: i32) -> (i32, i32) {
    %c0_i32 = arith.constant 0 : i32
    %c0_i32_0 = arith.constant 0 : i32
    %c0_i32_1 = arith.constant 0 : i32
    return %c0_i32, %c0_i32_0 : i32, i32
  }
  func.func @transform_7(%arg0: i32) -> (i32, i32) {
    %c0_i32 = arith.constant 0 : i32
    %c0_i32_0 = arith.constant 0 : i32
    return %arg0, %c0_i32 : i32, i32
  }
}

</mosaic_0001>

<llo_original>
// kernel: tpu_custom_call.1
$region0: #{tpu_custom_call.1}
  #allocation0 [shape = 'u32[]', space=smem, size = 0x4, offset = 0x4, fixed_abs, tag = 'smem constant byte address 0x4 - core index']
  #allocation1 [shape = 'u32[144,128]{1,0:T(1,128)}', space=vmem, size = 0x12000, scoped, tag = 'internal scratch']
  %s0 = inlined_call_operand.vmem [shape: f32[32,16], index: 0, kind: input, shape index: {}]
  %s1 = inlined_call_operand.vmem [shape: bf16[16,128], index: 1, kind: input, shape index: {}]
  %s2 = inlined_call_operand.vmem [shape: f32[1,128], index: 2, kind: input, shape index: {}]
  %s3 = inlined_call_operand.hbm [shape: bf16[128,128], index: 3, kind: input, shape index: {}]
  %s4 = inlined_call_operand.vmem [shape: f32[1,128], index: 4, kind: input, shape index: {}]
  %s5 = inlined_call_operand.hbm [shape: bf16[128,128], index: 5, kind: input, shape index: {}]
  %s6 = inlined_call_operand.vmem [shape: f32[1,128], index: 6, kind: input, shape index: {}]
  %s7 = inlined_call_operand.hbm [shape: f32[32,128], index: 7, kind: output, shape index: {}]
  %s8 = sld [smem:[#allocation0]]
  $region46: #{tpu_custom_call.1} parent=0
    _
  %s10 = ssub.s32 1, %s8
  %s11 = scalar_select 0, %s10, %s8
  $region1: #{tpu_custom_call.1} parent=0
    #allocation2 [shape = 'u8[32768]{0}', space=vmem, size = 0x8000, scoped, tag = 'input window, operand 3, single buffered']
    #allocation3 [shape = 's32[1]{0}', space=sflag, size = 0x4, scoped, tag = 'scoped memory for tpu_custom_call.1']
    #allocation4 [shape = 's32[1]{0}', space=sflag, size = 0x4, scoped, tag = 'scoped memory for tpu_custom_call.1']
    #allocation5 [shape = 'u8[32768]{0}', space=vmem, size = 0x8000, scoped, tag = 'input window, operand 5, single buffered']
    #allocation6 [shape = 's32[1]{0}', space=sflag, size = 0x4, scoped, tag = 'scoped memory for tpu_custom_call.1']
    #allocation7 [shape = 'u8[16384]{0}', space=vmem, size = 0x4000, scoped, tag = 'output window, operand 0, single buffered']
    %12 = vsyncpa [#allocation3], 0
    %13 = vsyncpa [#allocation6], 0
    %14 = vsyncpa [#allocation4], 0
    // Predicated region
    $region2: #{tpu_custom_call.1} parent=1 // pred_check
      _
    $region3: #{tpu_custom_call.1} parent=1 // pred_check_branch
      %16 = sbr.rel (0) target = $region5
    $region4: #{tpu_custom_call.1} parent=1 // pred_region
      _
    $region5: #{tpu_custom_call.1} parent=1 // pred_fallthru
      _
    // Predicated region
    $region6: #{tpu_custom_call.1} parent=1 // pred_check
      _
    $region7: #{tpu_custom_call.1} parent=1 // pred_check_branch
      %18 = sbr.rel (0) target = $region9
    $region8: #{tpu_custom_call.1} parent=1 // pred_region
      _
    $region9: #{tpu_custom_call.1} parent=1 // pred_fallthru
      _
    // Predicated region
    $region10: #{tpu_custom_call.1} parent=1 // pred_check
      _
    $region11: #{tpu_custom_call.1} parent=1 // pred_check_branch
      %20 = sbr.rel (0) target = $region13
    $region12: #{tpu_custom_call.1} parent=1 // pred_region
      _
    $region13: #{tpu_custom_call.1} parent=1 // pred_fallthru
      _
    // Predicated region
    $region14: #{tpu_custom_call.1} parent=1 // pred_check
      _
    $region15: #{tpu_custom_call.1} parent=1 // pred_check_branch
      %22 = sbr.rel (0) target = $region17
    $region16: #{tpu_custom_call.1} parent=1 // pred_region
      %s24 = ssub.s32 1024, 1024
      %25 = vsyncadd [#allocation3], %s24
      %s26 = sshll.u32 [#allocation2], 4
      %s27 = int_to_ptr.vmem [resolvable:$true] %s26
      %32 = dma.hbm_to_vmem [thread:$0]  %s3, 1024, %s27, [#allocation3], 64, 64, 4
    $region17: #{tpu_custom_call.1} parent=1 // pred_fallthru
      _
    // Predicated region
    $region18: #{tpu_custom_call.1} parent=1 // pred_check
      _
    $region19: #{tpu_custom_call.1} parent=1 // pred_check_branch
      %34 = sbr.rel (0) target = $region21
    $region20: #{tpu_custom_call.1} parent=1 // pred_region
      _
    $region21: #{tpu_custom_call.1} parent=1 // pred_fallthru
      _
    // Predicated region
    $region22: #{tpu_custom_call.1} parent=1 // pred_check
      _
    $region23: #{tpu_custom_call.1} parent=1 // pred_check_branch
      %36 = sbr.rel (0) target = $region25
    $region24: #{tpu_custom_call.1} parent=1 // pred_region
      %s38 = ssub.s32 1024, 1024
      %39 = vsyncadd [#allocation6], %s38
      %s40 = sshll.u32 [#allocation5], 4
      %s41 = int_to_ptr.vmem [resolvable:$true] %s40
      %46 = dma.hbm_to_vmem [thread:$0]  %s5, 1024, %s41, [#allocation6], 64, 64, 4
    $region25: #{tpu_custom_call.1} parent=1 // pred_fallthru
      _
    // Predicated region
    $region26: #{tpu_custom_call.1} parent=1 // pred_check
      _
    $region27: #{tpu_custom_call.1} parent=1 // pred_check_branch
      %48 = sbr.rel (0) target = $region29
    $region28: #{tpu_custom_call.1} parent=1 // pred_region
      _
    $region29: #{tpu_custom_call.1} parent=1 // pred_fallthru
      _
    // Predicated region
    $region30: #{tpu_custom_call.1} parent=1 // pred_check
      _
    $region31: #{tpu_custom_call.1} parent=1 // pred_check_branch
      %50 = sbr.rel (0) target = $region33
    $region32: #{tpu_custom_call.1} parent=1 // pred_region
      %51 = dma.done [#allocation3], 1024
    $region33: #{tpu_custom_call.1} parent=1 // pred_fallthru
      _
    // Predicated region
    $region34: #{tpu_custom_call.1} parent=1 // pred_check
      _
    $region35: #{tpu_custom_call.1} parent=1 // pred_check_branch
      %53 = sbr.rel (0) target = $region37
    $region36: #{tpu_custom_call.1} parent=1 // pred_region
      %54 = dma.done [#allocation6], 1024
    $region37: #{tpu_custom_call.1} parent=1 // pred_fallthru
      _
    %v56 = vld [vmem:[%s1] sm:$0xf]
    %v57 = vld [vmem:[%s1 + $0x4] sm:$0xf]
    %v58 = vld [vmem:[%s2] sm:$0x1]
    %v59 = vld [vmem:[#allocation2] sm:$0xf]
    %v60 = vld [vmem:[#allocation2 + $0x4] sm:$0xf]
    %v61 = vld [vmem:[#allocation2 + $0x8] sm:$0xf]
    %v62 = vld [vmem:[#allocation2 + $0xc] sm:$0xf]
    %v63 = vld [vmem:[#allocation2 + $0x10] sm:$0xf]
    %v64 = vld [vmem:[#allocation2 + $0x14] sm:$0xf]
    %v65 = vld [vmem:[#allocation2 + $0x18] sm:$0xf]
    %v66 = vld [vmem:[#allocation2 + $0x1c] sm:$0xf]
    %v67 = vld [vmem:[#allocation2 + $0x20] sm:$0xf]
    %v68 = vld [vmem:[#allocation2 + $0x24] sm:$0xf]
    %v69 = vld [vmem:[#allocation2 + $0x28] sm:$0xf]
    %v70 = vld [vmem:[#allocation2 + $0x2c] sm:$0xf]
    %v71 = vld [vmem:[#allocation2 + $0x30] sm:$0xf]
    %v72 = vld [vmem:[#allocation2 + $0x34] sm:$0xf]
    %v73 = vld [vmem:[#allocation2 + $0x38] sm:$0xf]
    %v74 = vld [vmem:[#allocation2 + $0x3c] sm:$0xf]
    %v75 = vld [vmem:[%s4] sm:$0x1]
    %v76 = vld [vmem:[#allocation5] sm:$0xf]
    %v77 = vld [vmem:[#allocation5 + $0x4] sm:$0xf]
    %v78 = vld [vmem:[#allocation5 + $0x8] sm:$0xf]
    %v79 = vld [vmem:[#allocation5 + $0xc] sm:$0xf]
    %v80 = vld [vmem:[#allocation5 + $0x10] sm:$0xf]
    %v81 = vld [vmem:[#allocation5 + $0x14] sm:$0xf]
    %v82 = vld [vmem:[#allocation5 + $0x18] sm:$0xf]
    %v83 = vld [vmem:[#allocation5 + $0x1c] sm:$0xf]
    %v84 = vld [vmem:[#allocation5 + $0x20] sm:$0xf]
    %v85 = vld [vmem:[#allocation5 + $0x24] sm:$0xf]
    %v86 = vld [vmem:[#allocation5 + $0x28] sm:$0xf]
    %v87 = vld [vmem:[#allocation5 + $0x2c] sm:$0xf]
    %v88 = vld [vmem:[#allocation5 + $0x30] sm:$0xf]
    %v89 = vld [vmem:[#allocation5 + $0x34] sm:$0xf]
    %v90 = vld [vmem:[#allocation5 + $0x38] sm:$0xf]
    %v91 = vld [vmem:[#allocation5 + $0x3c] sm:$0xf]
    %v92 = vld [vmem:[%s6] sm:$0x1]
    %v93 = vld [vmem:[%s0] sm:$0xff]
    %v94 = vld [vmem:[%s0 + $0x8] sm:$0xff]
    %v95 = vld [vmem:[%s0 + $0x10] sm:$0xff]
    %v96 = vld [vmem:[%s0 + $0x18] sm:$0xff]
    %v97 = vpack.c.bf16 %v94, %v93
    %v98 = vpack.c.bf16 %v96, %v95
    %v100 = vlaneseq
    %v101 = vshrl.u32 %v100, 7
    %v102 = vsub.s32 0, %v101
    %v103 = vrot.slane %v58, %v102
    %v107 = vunpack.c.l.b16 %v56
    %v108 = vunpack.c.l.b16 %v57
    %v109 = vpack.c.b16 %v108, %v107
    %vm111 = vcmask 130048
    %v113 = vsel %vm111, %v97, 0
    %v116 = vsel %vm111, %v98, 0
    %118 = vmatprep.subr.bf16.mxu0 0
    %119 = vmatpush1.bf16.msra.mxu0 0
    %120 = vmatprep.subr.bf16.mxu0 0
    %121 = vmatpush1.bf16.msra.mxu0 0
    %122 = vmatprep.subr.bf16.mxu0 0
    %123 = vmatpush1.bf16.msra.mxu0 0
    %124 = vmatprep.subr.bf16.mxu0 0
    %125 = vmatpush1.bf16.msra.mxu0 0
    %126 = vmatprep.subr.bf16.mxu0 0
    %127 = vmatpush1.bf16.msra.mxu0 0
    %128 = vmatprep.subr.bf16.mxu0 0
    %129 = vmatpush1.bf16.msra.mxu0 0
    %130 = vmatprep.subr.bf16.mxu0 0
    %131 = vmatpush1.bf16.msra.mxu0 0
    %132 = vmatprep.subr.bf16.mxu0 0
    %133 = vmatpush1.bf16.msra.mxu0 %v109
    %134 = vmatprep.subr.bf16.mxu0 0
    %135 = vmatpush2.bf16.msra.mxu0 0
    %136 = vmatprep.subr.bf16.mxu0 0
    %137 = vmatpush2.bf16.msra.mxu0 0
    %138 = vmatprep.subr.bf16.mxu0 0
    %139 = vmatpush2.bf16.msra.mxu0 0
    %140 = vmatprep.subr.bf16.mxu0 0
    %141 = vmatpush2.bf16.msra.mxu0 0
    %142 = vmatprep.subr.bf16.mxu0 0
    %143 = vmatpush2.bf16.msra.mxu0 0
    %144 = vmatprep.subr.bf16.mxu0 0
    %145 = vmatpush2.bf16.msra.mxu0 0
    %146 = vmatprep.subr.bf16.mxu0 0
    %147 = vmatpush2.bf16.msra.mxu0 0
    %148 = vmatprep.subr.bf16.mxu0 0
    %149 = vmatpush2.bf16.msra.mxu0 0
    %150 = vmatprep.mubr.bf16.mxu0 0
    %151 = vmatmul.mubr.bf16.gmra.mxu0 %v113
    %v152 = vpop.f32.mrf.mxu0
    %v153 = vadd.f32 %v103, %v152
    %v154 = vpop.f32.mrf.mxu0
    %v155 = vpop.f32.mrf.mxu0
    %v156 = vadd.f32 %v103, %v155
    %v157 = vpop.f32.mrf.mxu0
    %158 = vmatprep.mubr.bf16.mxu0 0
    %159 = vmatmul.mubr.bf16.gmra.mxu0 %v116
    %v160 = vpop.f32.mrf.mxu0
    %v161 = vadd.f32 %v103, %v160
    %v162 = vpop.f32.mrf.mxu0
    %v163 = vpop.f32.mrf.mxu0
    %v164 = vadd.f32 %v103, %v163
    %v165 = vpop.f32.mrf.mxu0
    %166 = vdwg.mxu0
    %v167 = vtanh.pop %v153
    %v168 = vtanh.pop %v156
    %v169 = vtanh.pop %v161
    %v170 = vtanh.pop %v164
    %v171 = vpack.c.bf16 %v168, %v167
    %v172 = vpack.c.bf16 %v170, %v169
    %v174 = vlaneseq
    %v175 = vshrl.u32 %v174, 7
    %v176 = vsub.s32 0, %v175
    %v177 = vrot.slane %v75, %v176
    %v195 = vunpack.c.l.b16 %v59
    %v196 = vunpack.c.l.b16 %v60
    %v197 = vunpack.c.l.b16 %v61
    %v198 = vunpack.c.l.b16 %v62
    %v199 = vunpack.c.l.b16 %v63
    %v200 = vunpack.c.l.b16 %v64
    %v201 = vunpack.c.l.b16 %v65
    %v202 = vunpack.c.l.b16 %v66
    %v203 = vunpack.c.l.b16 %v67
    %v204 = vunpack.c.l.b16 %v68
    %v205 = vunpack.c.l.b16 %v69
    %v206 = vunpack.c.l.b16 %v70
    %v207 = vunpack.c.l.b16 %v71
    %v208 = vunpack.c.l.b16 %v72
    %v209 = vunpack.c.l.b16 %v73
    %v210 = vunpack.c.l.b16 %v74
    %v211 = vpack.c.b16 %v196, %v195
    %v212 = vpack.c.b16 %v198, %v197
    %v213 = vpack.c.b16 %v200, %v199
    %v214 = vpack.c.b16 %v202, %v201
    %v215 = vpack.c.b16 %v204, %v203
    %v216 = vpack.c.b16 %v206, %v205
    %v217 = vpack.c.b16 %v208, %v207
    %v218 = vpack.c.b16 %v210, %v209
    %227 = vmatprep.subr.bf16.mxu0 0
    %228 = vmatpush1.bf16.msra.mxu0 %v218
    %229 = vmatprep.subr.bf16.mxu0 0
    %230 = vmatpush1.bf16.msra.mxu0 %v217
    %231 = vmatprep.subr.bf16.mxu0 0
    %232 = vmatpush1.bf16.msra.mxu0 %v216
    %233 = vmatprep.subr.bf16.mxu0 0
    %234 = vmatpush1.bf16.msra.mxu0 %v215
    %235 = vmatprep.subr.bf16.mxu0 0
    %236 = vmatpush1.bf16.msra.mxu0 %v214
    %237 = vmatprep.subr.bf16.mxu0 0
    %238 = vmatpush1.bf16.msra.mxu0 %v213
    %239 = vmatprep.subr.bf16.mxu0 0
    %240 = vmatpush1.bf16.msra.mxu0 %v212
    %241 = vmatprep.subr.bf16.mxu0 0
    %242 = vmatpush1.bf16.msra.mxu0 %v211
    %243 = vmatprep.subr.bf16.mxu0 0
    %244 = vmatpush2.bf16.msra.mxu0 0
    %245 = vmatprep.subr.bf16.mxu0 0
    %246 = vmatpush2.bf16.msra.mxu0 0
    %247 = vmatprep.subr.bf16.mxu0 0
    %248 = vmatpush2.bf16.msra.mxu0 0
    %249 = vmatprep.subr.bf16.mxu0 0
    %250 = vmatpush2.bf16.msra.mxu0 0
    %251 = vmatprep.subr.bf16.mxu0 0
    %252 = vmatpush2.bf16.msra.mxu0 0
    %253 = vmatprep.subr.bf16.mxu0 0
    %254 = vmatpush2.bf16.msra.mxu0 0
    %255 = vmatprep.subr.bf16.mxu0 0
    %256 = vmatpush2.bf16.msra.mxu0 0
    %257 = vmatprep.subr.bf16.mxu0 0
    %258 = vmatpush2.bf16.msra.mxu0 0
    %259 = vmatprep.mubr.bf16.mxu0 0
    %260 = vmatmul.mubr.bf16.gmra.mxu0 %v171
    %v261 = vpop.f32.mrf.mxu0
    %v262 = vadd.f32 %v177, %v261
    %v263 = vpop.f32.mrf.mxu0
    %v264 = vpop.f32.mrf.mxu0
    %v265 = vadd.f32 %v177, %v264
    %v266 = vpop.f32.mrf.mxu0
    %267 = vmatprep.mubr.bf16.mxu0 0
    %268 = vmatmul.mubr.bf16.gmra.mxu0 %v172
    %v269 = vpop.f32.mrf.mxu0
    %v270 = vadd.f32 %v177, %v269
    %v271 = vpop.f32.mrf.mxu0
    %v272 = vpop.f32.mrf.mxu0
    %v273 = vadd.f32 %v177, %v272
    %v274 = vpop.f32.mrf.mxu0
    %275 = vdwg.mxu0
    %v276 = vtanh.pop %v262
    %v277 = vtanh.pop %v265
    %v278 = vtanh.pop %v270
    %v279 = vtanh.pop %v273
    %v280 = vpack.c.bf16 %v277, %v276
    %v281 = vpack.c.bf16 %v279, %v278
    %v283 = vlaneseq
    %v284 = vshrl.u32 %v283, 7
    %v285 = vsub.s32 0, %v284
    %v286 = vrot.slane %v92, %v285
    %v304 = vunpack.c.l.b16 %v76
    %v305 = vunpack.c.l.b16 %v77
    %v306 = vunpack.c.l.b16 %v78
    %v307 = vunpack.c.l.b16 %v79
    %v308 = vunpack.c.l.b16 %v80
    %v309 = vunpack.c.l.b16 %v81
    %v310 = vunpack.c.l.b16 %v82
    %v311 = vunpack.c.l.b16 %v83
    %v312 = vunpack.c.l.b16 %v84
    %v313 = vunpack.c.l.b16 %v85
    %v314 = vunpack.c.l.b16 %v86
    %v315 = vunpack.c.l.b16 %v87
    %v316 = vunpack.c.l.b16 %v88
    %v317 = vunpack.c.l.b16 %v89
    %v318 = vunpack.c.l.b16 %v90
    %v319 = vunpack.c.l.b16 %v91
    %v320 = vpack.c.b16 %v305, %v304
    %v321 = vpack.c.b16 %v307, %v306
    %v322 = vpack.c.b16 %v309, %v308
    %v323 = vpack.c.b16 %v311, %v310
    %v324 = vpack.c.b16 %v313, %v312
    %v325 = vpack.c.b16 %v315, %v314
    %v326 = vpack.c.b16 %v317, %v316
    %v327 = vpack.c.b16 %v319, %v318
    %336 = vmatprep.subr.bf16.mxu0 0
    %337 = vmatpush1.bf16.msra.mxu0 %v327
    %338 = vmatprep.subr.bf16.mxu0 0
    %339 = vmatpush1.bf16.msra.mxu0 %v326
    %340 = vmatprep.subr.bf16.mxu0 0
    %341 = vmatpush1.bf16.msra.mxu0 %v325
    %342 = vmatprep.subr.bf16.mxu0 0
    %343 = vmatpush1.bf16.msra.mxu0 %v324
    %344 = vmatprep.subr.bf16.mxu0 0
    %345 = vmatpush1.bf16.msra.mxu0 %v323
    %346 = vmatprep.subr.bf16.mxu0 0
    %347 = vmatpush1.bf16.msra.mxu0 %v322
    %348 = vmatprep.subr.bf16.mxu0 0
    %349 = vmatpush1.bf16.msra.mxu0 %v321
    %350 = vmatprep.subr.bf16.mxu0 0
    %351 = vmatpush1.bf16.msra.mxu0 %v320
    %352 = vmatprep.subr.bf16.mxu0 0
    %353 = vmatpush2.bf16.msra.mxu0 0
    %354 = vmatprep.subr.bf16.mxu0 0
    %355 = vmatpush2.bf16.msra.mxu0 0
    %356 = vmatprep.subr.bf16.mxu0 0
    %357 = vmatpush2.bf16.msra.mxu0 0
    %358 = vmatprep.subr.bf16.mxu0 0
    %359 = vmatpush2.bf16.msra.mxu0 0
    %360 = vmatprep.subr.bf16.mxu0 0
    %361 = vmatpush2.bf16.msra.mxu0 0
    %362 = vmatprep.subr.bf16.mxu0 0
    %363 = vmatpush2.bf16.msra.mxu0 0
    %364 = vmatprep.subr.bf16.mxu0 0
    %365 = vmatpush2.bf16.msra.mxu0 0
    %366 = vmatprep.subr.bf16.mxu0 0
    %367 = vmatpush2.bf16.msra.mxu0 0
    %368 = vmatprep.mubr.bf16.mxu0 0
    %369 = vmatmul.mubr.bf16.gmra.mxu0 %v280
    %v370 = vpop.f32.mrf.mxu0
    %v371 = vadd.f32 %v286, %v370
    %v372 = vpop.f32.mrf.mxu0
    %v373 = vpop.f32.mrf.mxu0
    %v374 = vadd.f32 %v286, %v373
    %v375 = vpop.f32.mrf.mxu0
    %376 = vmatprep.mubr.bf16.mxu0 0
    %377 = vmatmul.mubr.bf16.gmra.mxu0 %v281
    %v378 = vpop.f32.mrf.mxu0
    %v379 = vadd.f32 %v286, %v378
    %v380 = vpop.f32.mrf.mxu0
    %v381 = vpop.f32.mrf.mxu0
    %v382 = vadd.f32 %v286, %v381
    %v383 = vpop.f32.mrf.mxu0
    %384 = vdwg.mxu0
    %385 = vst [vmem:[#allocation7] sm:$0xff] %v371
    %386 = vst [vmem:[#allocation7 + $0x8] sm:$0xff] %v374
    %387 = vst [vmem:[#allocation7 + $0x10] sm:$0xff] %v379
    %388 = vst [vmem:[#allocation7 + $0x18] sm:$0xff] %v382
    // Predicated region
    $region38: #{tpu_custom_call.1} parent=1 // pred_check
      _
    $region39: #{tpu_custom_call.1} parent=1 // pred_check_branch
      %390 = sbr.rel (0) target = $region41
    $region40: #{tpu_custom_call.1} parent=1 // pred_region
      %s392 = ssub.s32 512, 512
      %393 = vsyncadd [#allocation4], %s392
      %s394 = sshll.u32 [#allocation7], 4
      %s395 = int_to_ptr.vmem [resolvable:$true] %s394
      %400 = dma.vmem_to_hbm [thread:$0]  %s395, 512, %s7, [#allocation4], 128, 128, 8
    $region41: #{tpu_custom_call.1} parent=1 // pred_fallthru
      _
    // Predicated region
    $region42: #{tpu_custom_call.1} parent=1 // pred_check
      _
    $region43: #{tpu_custom_call.1} parent=1 // pred_check_branch
      %402 = sbr.rel (0) target = $region45
    $region44: #{tpu_custom_call.1} parent=1 // pred_region
      %403 = dma.done [#allocation4], 512
    $region45: #{tpu_custom_call.1} parent=1 // pred_fallthru
      _
    %404 = vsyncpa [#allocation3], 1
    %405 = vsyncpa [#allocation6], 1
    %406 = vsyncpa [#allocation4], 1

</llo_original>
